<compile_context>
chip_gen: v7x
topology: tpu7x:2x2x1
jax: 0.10.0
libtpu: 0.0.40
codegen_flags: <defaults>
</compile_context>

<pallas_src>
import functools

import jax
import jax.numpy as jnp
from jax.experimental import pallas as pl
from jax.experimental.pallas import tpu as pltpu


def _mpp_loss_kernel(logits_ref, target_ref, mask_ref,
                     loss_out_ref, cnt_out_ref,
                     loss_acc, cnt_acc):
    """Grid is (B, N_tiles); each step processes one lane-dense (K, T) tile.

    logits_ref / target_ref : (1, K, T)   class bins on sublanes, patches on lanes
    mask_ref                : (1, 1, T)   int32 (0 / 1)
    loss_out_ref/cnt_out_ref: (1, 8, 128) per-batch partial sums (scalar broadcast)
    loss_acc / cnt_acc      : (1, T)      f32 VMEM lane-dense accumulators
    """
    nt = pl.program_id(1)

    @pl.when(nt == 0)
    def _():
        loss_acc[...] = jnp.zeros_like(loss_acc)
        cnt_acc[...] = jnp.zeros_like(cnt_acc)

    logits = logits_ref[0].astype(jnp.float32)     # (K, T)
    tgt = target_ref[0].astype(jnp.float32)        # (K, T)
    msk = mask_ref[0] != 0                         # (1, T) bool

    k = logits.shape[0]

    # --- log-sum-exp over the class (sublane) axis, numerically stable ---
    row_max = jnp.max(logits, axis=0, keepdims=True)                    # (1, T)
    lse = row_max + jnp.log(
        jnp.sum(jnp.exp(logits - row_max), axis=0, keepdims=True))      # (1, T)

    # --- argmax(target, class axis) with first-occurrence tie-break ---
    kidx = jax.lax.broadcasted_iota(jnp.int32, tgt.shape, 0)            # (K, T)
    tmax = jnp.max(tgt, axis=0, keepdims=True)                          # (1, T)
    first_idx = jnp.min(jnp.where(tgt >= tmax, kidx, k),
                        axis=0, keepdims=True)                          # (1, T)

    # Gather logits[label, col] via select+sum (no dynamic gather on TPU).
    label_logit = jnp.sum(jnp.where(kidx == first_idx, logits, 0.0),
                          axis=0, keepdims=True)                        # (1, T)

    per_col = lse - label_logit                                         # (1, T)

    # Lane-dense vector accumulation (masked / padded columns contribute 0).
    loss_acc[...] += jnp.where(msk, per_col, 0.0)
    cnt_acc[...] += jnp.where(msk, 1.0, 0.0)

    # Last tile of this batch element: reduce the accumulators to scalars once
    # and emit per-batch partial sums (combined + divided in the wrapper).
    @pl.when(nt == pl.num_programs(1) - 1)
    def _():
        loss_out_ref[...] = jnp.full(loss_out_ref.shape,
                                     jnp.sum(loss_acc[...]), dtype=jnp.float32)
        cnt_out_ref[...] = jnp.full(cnt_out_ref.shape,
                                    jnp.sum(cnt_acc[...]), dtype=jnp.float32)


@functools.partial(jax.jit, static_argnames=("tile_cols",))
def mpp_loss(predicted_patches, target, mask, *, tile_cols=2048):
    """predicted_patches: (B, N, K) logits; target: (B, K, N); mask: (B, N) bool."""
    B, N, K = predicted_patches.shape
    assert target.shape == (B, K, N)
    assert mask.shape == (B, N)

    # Lane tile: multiple of 128, clamped to the (rounded-up) patch count.
    tile_cols = max(128, (int(tile_cols) // 128) * 128)
    T = min(tile_cols, pl.cdiv(N, 128) * 128)

    # Lane-dense layout: K on sublanes, patches on lanes.  `target` is already
    # (B, K, N) -> used natively; only the logits get a single relayout.
    # Native dtypes are kept (bf16 inputs stay bf16 over HBM; cast in-kernel).
    logits = jnp.transpose(predicted_patches, (0, 2, 1))   # (B, K, N)
    tgt = target                                           # (B, K, N) native
    msk = mask[:, None, :].astype(jnp.int32)               # (B, 1, N)
    # TODO(synk): mask could be shipped as int8 to shave a few % of HBM traffic;
    # int32 kept here for maximally robust lowering (mask is <=1/8 of traffic).

    # Ragged tail: pad the lane axis up to a tile multiple; padded columns carry
    # mask==0 so they contribute nothing.  No-op when N is already a multiple
    # (the common power-of-two patch-count case).
    N_pad = pl.cdiv(N, T) * T
    if N_pad != N:
        pad = N_pad - N
        logits = jnp.pad(logits, ((0, 0), (0, 0), (0, pad)))
        tgt = jnp.pad(tgt, ((0, 0), (0, 0), (0, pad)))
        msk = jnp.pad(msk, ((0, 0), (0, 0), (0, pad)))

    grid = (B, N_pad // T)

    loss_parts, cnt_parts = pl.pallas_call(
        _mpp_loss_kernel,
        out_shape=(
            jax.ShapeDtypeStruct((B, 8, 128), jnp.float32),
            jax.ShapeDtypeStruct((B, 8, 128), jnp.float32),
        ),
        grid_spec=pltpu.PrefetchScalarGridSpec(
            num_scalar_prefetch=0,
            grid=grid,
            in_specs=[
                pl.BlockSpec((1, K, T), lambda b, nt: (b, 0, nt)),
                pl.BlockSpec((1, K, T), lambda b, nt: (b, 0, nt)),
                pl.BlockSpec((1, 1, T), lambda b, nt: (b, 0, nt)),
            ],
            out_specs=(
                pl.BlockSpec((1, 8, 128), lambda b, nt: (b, 0, 0)),
                pl.BlockSpec((1, 8, 128), lambda b, nt: (b, 0, 0)),
            ),
            scratch_shapes=[
                pltpu.VMEM((1, T), jnp.float32),
                pltpu.VMEM((1, T), jnp.float32),
            ],
        ),
        compiler_params=pltpu.CompilerParams(
            dimension_semantics=("parallel", "arbitrary")),
    )(logits, tgt, msk)

    total_loss = jnp.sum(loss_parts[:, 0, 0])
    total_cnt = jnp.sum(cnt_parts[:, 0, 0])
    return total_loss / total_cnt


def mpp_loss_reference(predicted_patches, target, mask):
    """Pure-JAX reference mirroring torch: CE(pred[mask], target.argmax(1)[mask])."""
    B, N, K = predicted_patches.shape
    labels = jnp.argmax(target, axis=1)                     # (B, N)
    logits = predicted_patches.reshape(B * N, K).astype(jnp.float32)
    labels = labels.reshape(B * N)
    msk = mask.reshape(B * N).astype(jnp.float32)
    lse = jax.scipy.special.logsumexp(logits, axis=-1)
    picked = jnp.take_along_axis(logits, labels[:, None], axis=-1)[:, 0]
    per_row = lse - picked
    return jnp.sum(per_row * msk) / jnp.sum(msk)


if __name__ == "__main__":
    # Module hyper-params (deterministic, in-script).
    channels = 1
    output_channel_bits = 3
    max_pixel_val = 1.0
    mean = [0.5]
    std = [0.5]
    # Unused-in-forward buffers, kept for parity with the torch module:
    _mean_buf = jnp.asarray(mean, jnp.float32).reshape(-1, 1, 1)
    _std_buf = jnp.asarray(std, jnp.float32).reshape(-1, 1, 1)

    num_bins = (2 ** output_channel_bits) ** channels       # K = 8

    # --- test 1: tiny f32 case, single lane tile per batch element ---
    B, N, K = 2, 8, num_bins
    key = jax.random.PRNGKey(0)
    k1, k2, k3 = jax.random.split(key, 3)
    predicted_patches = jax.random.normal(k1, (B, N, K), dtype=jnp.float32)
    target = jax.random.uniform(k2, (B, K, N), dtype=jnp.float32)   # argmax(dim=1) -> labels
    mask = jax.random.bernoulli(k3, 0.5, (B, N))
    mask = mask.at[0, 0].set(True)  # ensure at least one masked patch

    loss = jax.block_until_ready(mpp_loss(predicted_patches, target, mask))
    ref = jax.block_until_ready(mpp_loss_reference(predicted_patches, target, mask))
    assert jnp.allclose(loss, ref, rtol=1e-5, atol=1e-5), (loss, ref)

    # --- test 2: bf16 logits, ragged patch count, multiple lane tiles ---
    B2, N2 = 2, 300
    k4, k5, k6 = jax.random.split(jax.random.PRNGKey(1), 3)
    pred2 = jax.random.normal(k4, (B2, N2, K), dtype=jnp.bfloat16)
    tgt2 = jax.random.uniform(k5, (B2, K, N2), dtype=jnp.float32)
    msk2 = jax.random.bernoulli(k6, 0.3, (B2, N2))
    msk2 = msk2.at[0, 0].set(True)

    loss2 = jax.block_until_ready(mpp_loss(pred2, tgt2, msk2, tile_cols=128))
    ref2 = jax.block_until_ready(mpp_loss_reference(pred2, tgt2, msk2))
    assert jnp.allclose(loss2, ref2, rtol=1e-4, atol=1e-4), (loss2, ref2)

    print("KERNEL_OK")
</pallas_src>

<mosaic_0001>
module attributes {stable_mosaic.version = 11 : i64} {
  func.func @_mpp_loss_kernel(%arg0: i32, %arg1: i32, %arg2: memref<1x8x128xf32, #tpu.memory_space<vmem>>, %arg3: memref<1x8x128xf32, #tpu.memory_space<vmem>>, %arg4: memref<1x1x128xi32, #tpu.memory_space<vmem>>, %arg5: memref<1x8x128xf32, #tpu.memory_space<vmem>>, %arg6: memref<1x8x128xf32, #tpu.memory_space<vmem>>, %arg7: memref<1x128xf32, #tpu.memory_space<vmem>>, %arg8: memref<1x128xf32, #tpu.memory_space<vmem>>) attributes {dimension_semantics = [#tpu.dimension_semantics<parallel>, #tpu.dimension_semantics<arbitrary>], iteration_bounds = array<i64: 2, 1>, scalar_prefetch = 0 : i64, scratch_operands = 2 : i64, tpu.core_type = #tpu.core_type<tc>, window_params = [{transform_indices = @transform_0, window_bounds = array<i64: 1, 8, 128>}, {transform_indices = @transform_1, window_bounds = array<i64: 1, 8, 128>}, {transform_indices = @transform_2, window_bounds = array<i64: 1, 1, 128>}, {transform_indices = @transform_3, window_bounds = array<i64: 1, 8, 128>}, {transform_indices = @transform_4, window_bounds = array<i64: 1, 8, 128>}]} {
    %c0_i32 = arith.constant 0 : i32
    %0 = arith.cmpi eq, %arg1, %c0_i32 : i32
    %1 = arith.extui %0 : i1 to i32
    %c0_i32_0 = arith.constant 0 : i32
    %2 = arith.cmpi ne, %1, %c0_i32_0 : i32
    scf.if %2 {
      %cst_28 = arith.constant 0.000000e+00 : f32
      %50 = vector.broadcast %cst_28 : f32 to vector<1x128xf32>
      %c0_29 = arith.constant 0 : index
      %c0_30 = arith.constant 0 : index
      %51 = vector.load %arg7[%c0_29, %c0_30] : memref<1x128xf32, #tpu.memory_space<vmem>>, vector<1x128xf32>
      tpu.vector_store %arg7[%c0_29, %c0_30], %50 {strides = array<i32>} : memref<1x128xf32, #tpu.memory_space<vmem>>, vector<1x128xf32>,
      %cst_31 = arith.constant 0.000000e+00 : f32
      %52 = vector.broadcast %cst_31 : f32 to vector<1x128xf32>
      %c0_32 = arith.constant 0 : index
      %c0_33 = arith.constant 0 : index
      %53 = vector.load %arg8[%c0_32, %c0_33] : memref<1x128xf32, #tpu.memory_space<vmem>>, vector<1x128xf32>
      tpu.vector_store %arg8[%c0_32, %c0_33], %52 {strides = array<i32>} : memref<1x128xf32, #tpu.memory_space<vmem>>, vector<1x128xf32>,
    } else {
    }
    %c0 = arith.constant 0 : index
    %c0_1 = arith.constant 0 : index
    %c0_2 = arith.constant 0 : index
    %3 = vector.load %arg2[%c0, %c0_1, %c0_2] : memref<1x8x128xf32, #tpu.memory_space<vmem>>, vector<1x8x128xf32>
    %4 = vector.shape_cast %3 : vector<1x8x128xf32> to vector<8x128xf32>
    %c0_3 = arith.constant 0 : index
    %c0_4 = arith.constant 0 : index
    %c0_5 = arith.constant 0 : index
    %5 = vector.load %arg3[%c0_3, %c0_4, %c0_5] : memref<1x8x128xf32, #tpu.memory_space<vmem>>, vector<1x8x128xf32>
    %6 = vector.shape_cast %5 : vector<1x8x128xf32> to vector<8x128xf32>
    %c0_6 = arith.constant 0 : index
    %c0_7 = arith.constant 0 : index
    %c0_8 = arith.constant 0 : index
    %7 = vector.load %arg4[%c0_6, %c0_7, %c0_8] : memref<1x1x128xi32, #tpu.memory_space<vmem>>, vector<1x1x128xi32>
    %8 = vector.shape_cast %7 : vector<1x1x128xi32> to vector<1x128xi32>
    %c0_i32_9 = arith.constant 0 : i32
    %9 = vector.broadcast %c0_i32_9 : i32 to vector<1x128xi32>
    %10 = arith.cmpi ne, %8, %9 : vector<1x128xi32>
    %cst = arith.constant dense<0xFF800000> : vector<128xf32>
    %11 = vector.multi_reduction <maximumf>, %4, %cst [0] : vector<8x128xf32> to vector<128xf32>
    %12 = vector.shape_cast %11 : vector<128xf32> to vector<1x128xf32>
    %13 = vector.broadcast %12 : vector<1x128xf32> to vector<8x128xf32>
    %14 = arith.subf %4, %13 : vector<8x128xf32>
    %15 = math.exp %14 : vector<8x128xf32>
    %cst_10 = arith.constant dense<0.000000e+00> : vector<128xf32>
    %16 = vector.multi_reduction <add>, %15, %cst_10 [0] : vector<8x128xf32> to vector<128xf32>
    %17 = vector.shape_cast %16 : vector<128xf32> to vector<1x128xf32>
    %18 = math.log %17 : vector<1x128xf32>
    %19 = arith.addf %12, %18 : vector<1x128xf32>
    %20 = tpu.iota {dimensions = array<i32: 0>} : vector<8x128xi32>
    %cst_11 = arith.constant dense<0xFF800000> : vector<128xf32>
    %21 = vector.multi_reduction <maximumf>, %6, %cst_11 [0] : vector<8x128xf32> to vector<128xf32>
    %22 = vector.shape_cast %21 : vector<128xf32> to vector<1x128xf32>
    %23 = vector.broadcast %22 : vector<1x128xf32> to vector<8x128xf32>
    %24 = arith.cmpf oge, %6, %23 : vector<8x128xf32>
    %c8_i32 = arith.constant 8 : i32
    %25 = vector.broadcast %c8_i32 : i32 to vector<8x128xi32>
    %26 = arith.select %24, %20, %25 : vector<8x128xi1>, vector<8x128xi32>
    %cst_12 = arith.constant dense<2147483647> : vector<128xi32>
    %27 = vector.multi_reduction <minsi>, %26, %cst_12 [0] : vector<8x128xi32> to vector<128xi32>
    %28 = vector.shape_cast %27 : vector<128xi32> to vector<1x128xi32>
    %29 = vector.broadcast %28 : vector<1x128xi32> to vector<8x128xi32>
    %30 = arith.cmpi eq, %20, %29 : vector<8x128xi32>
    %cst_13 = arith.constant 0.000000e+00 : f32
    %31 = vector.broadcast %cst_13 : f32 to vector<8x128xf32>
    %32 = arith.select %30, %4, %31 : vector<8x128xi1>, vector<8x128xf32>
    %cst_14 = arith.constant dense<0.000000e+00> : vector<128xf32>
    %33 = vector.multi_reduction <add>, %32, %cst_14 [0] : vector<8x128xf32> to vector<128xf32>
    %34 = vector.shape_cast %33 : vector<128xf32> to vector<1x128xf32>
    %35 = arith.subf %19, %34 : vector<1x128xf32>
    %c0_15 = arith.constant 0 : index
    %c0_16 = arith.constant 0 : index
    %36 = vector.load %arg7[%c0_15, %c0_16] : memref<1x128xf32, #tpu.memory_space<vmem>>, vector<1x128xf32>
    %cst_17 = arith.constant 0.000000e+00 : f32
    %37 = vector.broadcast %cst_17 : f32 to vector<1x128xf32>
    %38 = arith.select %10, %35, %37 : vector<1x128xi1>, vector<1x128xf32>
    %39 = arith.addf %36, %38 : vector<1x128xf32>
    %c0_18 = arith.constant 0 : index
    %c0_19 = arith.constant 0 : index
    %40 = vector.load %arg7[%c0_18, %c0_19] : memref<1x128xf32, #tpu.memory_space<vmem>>, vector<1x128xf32>
    tpu.vector_store %arg7[%c0_18, %c0_19], %39 {strides = array<i32>} : memref<1x128xf32, #tpu.memory_space<vmem>>, vector<1x128xf32>,
    %c0_20 = arith.constant 0 : index
    %c0_21 = arith.constant 0 : index
    %41 = vector.load %arg8[%c0_20, %c0_21] : memref<1x128xf32, #tpu.memory_space<vmem>>, vector<1x128xf32>
    %cst_22 = arith.constant 1.000000e+00 : f32
    %cst_23 = arith.constant 0.000000e+00 : f32
    %42 = vector.broadcast %cst_22 : f32 to vector<1x128xf32>
    %43 = vector.broadcast %cst_23 : f32 to vector<1x128xf32>
    %44 = arith.select %10, %42, %43 : vector<1x128xi1>, vector<1x128xf32>
    %45 = arith.addf %41, %44 : vector<1x128xf32>
    %c0_24 = arith.constant 0 : index
    %c0_25 = arith.constant 0 : index
    %46 = vector.load %arg8[%c0_24, %c0_25] : memref<1x128xf32, #tpu.memory_space<vmem>>, vector<1x128xf32>
    tpu.vector_store %arg8[%c0_24, %c0_25], %45 {strides = array<i32>} : memref<1x128xf32, #tpu.memory_space<vmem>>, vector<1x128xf32>,
    %c0_i32_26 = arith.constant 0 : i32
    %47 = arith.cmpi eq, %arg1, %c0_i32_26 : i32
    %48 = arith.extui %47 : i1 to i32
    %c0_i32_27 = arith.constant 0 : i32
    %49 = arith.cmpi ne, %48, %c0_i32_27 : i32
    scf.if %49 {
      %c0_28 = arith.constant 0 : index
      %c0_29 = arith.constant 0 : index
      %50 = vector.load %arg7[%c0_28, %c0_29] : memref<1x128xf32, #tpu.memory_space<vmem>>, vector<1x128xf32>
      %51 = vector.shape_cast %50 : vector<1x128xf32> to vector<1x1x128xf32>
      %cst_30 = arith.constant dense<0.000000e+00> : vector<1xf32>
      %52 = vector.multi_reduction <add>, %51, %cst_30 [1, 2] : vector<1x1x128xf32> to vector<1xf32>
      %53 = vector.shape_cast %52 : vector<1xf32> to vector<1x1x1xf32>
      %54 = vector.extract %53[0, 0, 0] : f32 from vector<1x1x1xf32>
      %55 = vector.broadcast %54 : f32 to vector<1x8x128xf32>
      %c0_31 = arith.constant 0 : index
      %c0_32 = arith.constant 0 : index
      %c0_33 = arith.constant 0 : index
      %56 = vector.load %arg5[%c0_31, %c0_32, %c0_33] : memref<1x8x128xf32, #tpu.memory_space<vmem>>, vector<1x8x128xf32>
      tpu.vector_store %arg5[%c0_31, %c0_32, %c0_33], %55 {strides = array<i32>} : memref<1x8x128xf32, #tpu.memory_space<vmem>>, vector<1x8x128xf32>,
      %c0_34 = arith.constant 0 : index
      %c0_35 = arith.constant 0 : index
      %57 = vector.load %arg8[%c0_34, %c0_35] : memref<1x128xf32, #tpu.memory_space<vmem>>, vector<1x128xf32>
      %58 = vector.shape_cast %57 : vector<1x128xf32> to vector<1x1x128xf32>
      %cst_36 = arith.constant dense<0.000000e+00> : vector<1xf32>
      %59 = vector.multi_reduction <add>, %58, %cst_36 [1, 2] : vector<1x1x128xf32> to vector<1xf32>
      %60 = vector.shape_cast %59 : vector<1xf32> to vector<1x1x1xf32>
      %61 = vector.extract %60[0, 0, 0] : f32 from vector<1x1x1xf32>
      %62 = vector.broadcast %61 : f32 to vector<1x8x128xf32>
      %c0_37 = arith.constant 0 : index
      %c0_38 = arith.constant 0 : index
      %c0_39 = arith.constant 0 : index
      %63 = vector.load %arg6[%c0_37, %c0_38, %c0_39] : memref<1x8x128xf32, #tpu.memory_space<vmem>>, vector<1x8x128xf32>
      tpu.vector_store %arg6[%c0_37, %c0_38, %c0_39], %62 {strides = array<i32>} : memref<1x8x128xf32, #tpu.memory_space<vmem>>, vector<1x8x128xf32>,
    } else {
    }
    return
  }
  func.func @transform_0(%arg0: i32, %arg1: i32) -> (i32, i32, i32) {
    %c0_i32 = arith.constant 0 : i32
    %c0_i32_0 = arith.constant 0 : i32
    return %arg0, %c0_i32, %arg1 : i32, i32, i32
  }
  func.func @transform_1(%arg0: i32, %arg1: i32) -> (i32, i32, i32) {
    %c0_i32 = arith.constant 0 : i32
    %c0_i32_0 = arith.constant 0 : i32
    return %arg0, %c0_i32, %arg1 : i32, i32, i32
  }
  func.func @transform_2(%arg0: i32, %arg1: i32) -> (i32, i32, i32) {
    %c0_i32 = arith.constant 0 : i32
    %c0_i32_0 = arith.constant 0 : i32
    return %arg0, %c0_i32, %arg1 : i32, i32, i32
  }
  func.func @transform_3(%arg0: i32, %arg1: i32) -> (i32, i32, i32) {
    %c0_i32 = arith.constant 0 : i32
    %c0_i32_0 = arith.constant 0 : i32
    %c0_i32_1 = arith.constant 0 : i32
    return %arg0, %c0_i32, %c0_i32_0 : i32, i32, i32
  }
  func.func @transform_4(%arg0: i32, %arg1: i32) -> (i32, i32, i32) {
    %c0_i32 = arith.constant 0 : i32
    %c0_i32_0 = arith.constant 0 : i32
    %c0_i32_1 = arith.constant 0 : i32
    return %arg0, %c0_i32, %c0_i32_0 : i32, i32, i32
  }
}

</mosaic_0001>

<llo_original>
// kernel: mpp_loss.1
$region0: #{mpp_loss.1}
  #allocation0 [shape = 'u32[]', space=smem, size = 0x4, offset = 0x4, fixed_abs, tag = 'smem constant byte address 0x4 - core index']
  #allocation1 [shape = 'u32[144,128]{1,0:T(1,128)}', space=vmem, size = 0x12000, scoped, tag = 'internal scratch']
  #allocation2 [shape = 'f32[1,128]{1,0:T(1,128)}', space=vmem, size = 0x200, scoped, tag = 'scratch operand']
  #allocation3 [shape = 'f32[1,128]{1,0:T(1,128)}', space=vmem, size = 0x200, scoped, tag = 'scratch operand']
  %s0 = inlined_call_operand.vmem [shape: f32[2,8,128], index: 0, kind: input, shape index: {}]
  %s1 = inlined_call_operand.vmem [shape: f32[2,8,128], index: 1, kind: input, shape index: {}]
  %s2 = inlined_call_operand.vmem [shape: s32[2,1,128], index: 2, kind: input, shape index: {}]
  %s3 = inlined_call_operand.vmem [shape: f32[2,8,128], index: 3, kind: output, shape index: {0}]
  %s4 = inlined_call_operand.vmem [shape: f32[2,8,128], index: 4, kind: output, shape index: {1}]
  %5 = xla_tuple %s3, %s4
  %s6 = sld [smem:[#allocation0]]
  $region61: #{mpp_loss.1} parent=0
    _
  %s8 = ssub.s32 1, %s6
  %s9 = scalar_select 0, %s8, %s6
  loop: start=0, step=1, limit=4
  $region2: #{mpp_loss.1} parent=0 // loop_pre_header
    _
  $region3: #{mpp_loss.1} parent=0 // loop_header
    %s11 = sphi 0, %s15
    %p12 = scmp.ge.s32.totalorder %s11, 4
    %s18 = sphi 0, %s30
    %s19 = sphi 0, %s26
    %s20 = sphi 0, %s18
    %s21 = sphi 0, %s19
    %s22 = sphi 0, %s20
    %s23 = sphi 0, %s21
    %s35 = sphi 0, %s37
    %s38 = sphi 0, %s35
    %s39 = sphi 0, %s38
    %s55 = sphi 0, %s39
    %s63 = sphi 0, %s65
    %s66 = sphi 0, %s63
    %s67 = sphi 0, %s66
    %s83 = sphi 0, %s67
    %s91 = sphi 0, %s93
    %s94 = sphi 0, %s91
    %s95 = sphi 0, %s94
    %s111 = sphi 0, %s95
    %s117 = sphi 0, %s119
    %s120 = sphi 0, %s117
    %s121 = sphi 0, %s120
    %s137 = sphi 0, %s121
    %s143 = sphi 0, %s145
    %s146 = sphi 0, %s143
    %s147 = sphi 0, %s146
    %s163 = sphi 0, %s147
  $region4: #{mpp_loss.1} parent=0 // loop_header_branch
    %14 = sbr.rel (%p12) target = $region8
  $region5: #{mpp_loss.1} parent=0 // loop_body
    %s16 = ssub.s32 %s11, 1
    %s17 = ssub.s32 %s11, 2
    %s24 = sadd.s32 1, %s19
    %p25 = scmp.ge.s32.totalorder %s24, 1
    %s26 = scalar_select %p25, 0, %s24
    %s27 = sadd.s32 1, %s18
    %s28 = scalar_select %p25, %s27, %s18
    %p29 = scmp.ge.s32.totalorder %s28, 2
    %s30 = scalar_select %p29, 0, %s28
    %s31 = ssub.s32 %s18, %s30
    %s32 = ssub.s32 %s19, %s26
    %s33 = sor.u32 %s31, %s32
    %p34 = scmp.eq.s32.totalorder %s33, 0
    %s36 = sadd.s32 %s35, 1
    %s37 = scalar_select %p34, %s35, %s36
    %p40 = pneg %p34
    %p41 = scmp.eq.s32.totalorder %s11, 1
    %p42 = por %p40, %p41
    %p43 = scmp.ne.s32.totalorder %s35, %s38
    %p44 = scmp.eq.s32.totalorder %s11, 0
    %p45 = por %p43, %p44
    %p46 = scmp.ne.s32.totalorder %s35, %s38
    %p47 = scmp.eq.s32.totalorder %s16, 1
    %p48 = por %p46, %p47
    %p49 = scmp.ne.s32.totalorder %s38, %s39
    %p50 = scmp.eq.s32.totalorder %s16, 0
    %p51 = por %p49, %p50
    %p52 = scmp.ne.s32.totalorder %s38, %s39
    %p53 = scmp.eq.s32.totalorder %s17, 1
    %p54 = por %p52, %p53
    %p56 = scmp.ne.s32.totalorder %s39, %s55
    %p57 = scmp.eq.s32.totalorder %s17, 0
    %p58 = por %p56, %p57
    %s59 = ssub.s32 %s18, %s30
    %s60 = ssub.s32 %s19, %s26
    %s61 = sor.u32 %s59, %s60
    %p62 = scmp.eq.s32.totalorder %s61, 0
    %s64 = sadd.s32 %s63, 1
    %s65 = scalar_select %p62, %s63, %s64
    %p68 = pneg %p62
    %p69 = scmp.eq.s32.totalorder %s11, 1
    %p70 = por %p68, %p69
    %p71 = scmp.ne.s32.totalorder %s63, %s66
    %p72 = scmp.eq.s32.totalorder %s11, 0
    %p73 = por %p71, %p72
    %p74 = scmp.ne.s32.totalorder %s63, %s66
    %p75 = scmp.eq.s32.totalorder %s16, 1
    %p76 = por %p74, %p75
    %p77 = scmp.ne.s32.totalorder %s66, %s67
    %p78 = scmp.eq.s32.totalorder %s16, 0
    %p79 = por %p77, %p78
    %p80 = scmp.ne.s32.totalorder %s66, %s67
    %p81 = scmp.eq.s32.totalorder %s17, 1
    %p82 = por %p80, %p81
    %p84 = scmp.ne.s32.totalorder %s67, %s83
    %p85 = scmp.eq.s32.totalorder %s17, 0
    %p86 = por %p84, %p85
    %s87 = ssub.s32 %s18, %s30
    %s88 = ssub.s32 %s19, %s26
    %s89 = sor.u32 %s87, %s88
    %p90 = scmp.eq.s32.totalorder %s89, 0
    %s92 = sadd.s32 %s91, 1
    %s93 = scalar_select %p90, %s91, %s92
    %p96 = pneg %p90
    %p97 = scmp.eq.s32.totalorder %s11, 1
    %p98 = por %p96, %p97
    %p99 = scmp.ne.s32.totalorder %s91, %s94
    %p100 = scmp.eq.s32.totalorder %s11, 0
    %p101 = por %p99, %p100
    %p102 = scmp.ne.s32.totalorder %s91, %s94
    %p103 = scmp.eq.s32.totalorder %s16, 1
    %p104 = por %p102, %p103
    %p105 = scmp.ne.s32.totalorder %s94, %s95
    %p106 = scmp.eq.s32.totalorder %s16, 0
    %p107 = por %p105, %p106
    %p108 = scmp.ne.s32.totalorder %s94, %s95
    %p109 = scmp.eq.s32.totalorder %s17, 1
    %p110 = por %p108, %p109
    %p112 = scmp.ne.s32.totalorder %s95, %s111
    %p113 = scmp.eq.s32.totalorder %s17, 0
    %p114 = por %p112, %p113
    %s115 = ssub.s32 %s18, %s30
    %p116 = scmp.eq.s32.totalorder %s115, 0
    %s118 = sadd.s32 %s117, 1
    %s119 = scalar_select %p116, %s117, %s118
    %p122 = pneg %p116
    %p123 = scmp.eq.s32.totalorder %s11, 1
    %p124 = por %p122, %p123
    %p125 = scmp.ne.s32.totalorder %s117, %s120
    %p126 = scmp.eq.s32.totalorder %s11, 0
    %p127 = por %p125, %p126
    %p128 = scmp.ne.s32.totalorder %s117, %s120
    %p129 = scmp.eq.s32.totalorder %s16, 1
    %p130 = por %p128, %p129
    %p131 = scmp.ne.s32.totalorder %s120, %s121
    %p132 = scmp.eq.s32.totalorder %s16, 0
    %p133 = por %p131, %p132
    %p134 = scmp.ne.s32.totalorder %s120, %s121
    %p135 = scmp.eq.s32.totalorder %s17, 1
    %p136 = por %p134, %p135
    %p138 = scmp.ne.s32.totalorder %s121, %s137
    %p139 = scmp.eq.s32.totalorder %s17, 0
    %p140 = por %p138, %p139
    %s141 = ssub.s32 %s18, %s30
    %p142 = scmp.eq.s32.totalorder %s141, 0
    %s144 = sadd.s32 %s143, 1
    %s145 = scalar_select %p142, %s143, %s144
    %p148 = pneg %p142
    %p149 = scmp.eq.s32.totalorder %s11, 1
    %p150 = por %p148, %p149
    %p151 = scmp.ne.s32.totalorder %s143, %s146
    %p152 = scmp.eq.s32.totalorder %s11, 0
    %p153 = por %p151, %p152
    %p154 = scmp.ne.s32.totalorder %s143, %s146
    %p155 = scmp.eq.s32.totalorder %s16, 1
    %p156 = por %p154, %p155
    %p157 = scmp.ne.s32.totalorder %s146, %s147
    %p158 = scmp.eq.s32.totalorder %s16, 0
    %p159 = por %p157, %p158
    %p160 = scmp.ne.s32.totalorder %s146, %s147
    %p161 = scmp.eq.s32.totalorder %s17, 1
    %p162 = por %p160, %p161
    %p164 = scmp.ne.s32.totalorder %s147, %s163
    %p165 = scmp.eq.s32.totalorder %s17, 0
    %p166 = por %p164, %p165
    %p167 = scmp.le.s32.totalorder 1, %s11
    %p168 = scmp.lt.s32.totalorder %s11, 3
    %p169 = pnand %p167, %p168
    %p170 = pneg %p169
    // Predicated region
    $region9: #{mpp_loss.1} parent=5 // pred_check
      _
    $region10: #{mpp_loss.1} parent=5 // pred_check_branch
      %172 = sbr.rel (%p169) target = $region12
    $region11: #{mpp_loss.1} parent=5 // pred_region
      %s173 = ssub.s32 %s11, 1
    $region12: #{mpp_loss.1} parent=5 // pred_fallthru
      _
    %p174 = scmp.lt.s32.totalorder %s11, 2
    // Predicated region
    $region13: #{mpp_loss.1} parent=5 // pred_check
      %p175 = pneg %p174
    $region14: #{mpp_loss.1} parent=5 // pred_check_branch
      %177 = sbr.rel (%p175) target = $region16
    $region15: #{mpp_loss.1} parent=5 // pred_region
      // Predicated region
      $region17: #{mpp_loss.1} parent=15 // pred_check
        %p178 = pneg %p45
      $region18: #{mpp_loss.1} parent=15 // pred_check_branch
        %180 = sbr.rel (%p178) target = $region20
      $region19: #{mpp_loss.1} parent=15 // pred_region
        %p181 = scmp.lt.s32.totalorder %s18, 1
        %s182 = scalar_select %p181, %s18, 1
        %p183 = scmp.lt.s32.totalorder %s19, 0
        %s184 = scalar_select %p183, %s19, 0
        %s185 = sadd.s32 %s184, %s182
        %s186 = smul.addr %s185, 8
        %s187 = scalar_lea.vmem %s0, %s186
      $region20: #{mpp_loss.1} parent=15 // pred_fallthru
        _
      // Predicated region
      $region21: #{mpp_loss.1} parent=15 // pred_check
        %p188 = pneg %p73
      $region22: #{mpp_loss.1} parent=15 // pred_check_branch
        %190 = sbr.rel (%p188) target = $region24
      $region23: #{mpp_loss.1} parent=15 // pred_region
        %p191 = scmp.lt.s32.totalorder %s18, 1
        %s192 = scalar_select %p191, %s18, 1
        %p193 = scmp.lt.s32.totalorder %s19, 0
        %s194 = scalar_select %p193, %s19, 0
        %s195 = sadd.s32 %s194, %s192
        %s196 = smul.addr %s195, 8
        %s197 = scalar_lea.vmem %s1, %s196
      $region24: #{mpp_loss.1} parent=15 // pred_fallthru
        _
      // Predicated region
      $region25: #{mpp_loss.1} parent=15 // pred_check
        %p198 = pneg %p101
      $region26: #{mpp_loss.1} parent=15 // pred_check_branch
        %200 = sbr.rel (%p198) target = $region28
      $region27: #{mpp_loss.1} parent=15 // pred_region
        %p201 = scmp.lt.s32.totalorder %s18, 1
        %s202 = scalar_select %p201, %s18, 1
        %p203 = scmp.lt.s32.totalorder %s19, 0
        %s204 = scalar_select %p203, %s19, 0
        %s205 = sadd.s32 %s204, %s202
        %s206 = scalar_lea.vmem %s2, %s205
      $region28: #{mpp_loss.1} parent=15 // pred_fallthru
        _
    $region16: #{mpp_loss.1} parent=5 // pred_fallthru
      _
    %p207 = scmp.le.s32.totalorder 1, %s11
    %p208 = scmp.lt.s32.totalorder %s11, 3
    %p209 = pnand %p207, %p208
    %p210 = pneg %p209
    // Predicated region
    $region29: #{mpp_loss.1} parent=5 // pred_check
      _
    $region30: #{mpp_loss.1} parent=5 // pred_check_branch
      %212 = sbr.rel (%p209) target = $region32
    $region31: #{mpp_loss.1} parent=5 // pred_region
      %s213 = ssub.s32 %s11, 1
      %p214 = scmp.lt.s32.totalorder %s20, 1
      %s215 = scalar_select %p214, %s20, 1
      %p216 = scmp.lt.s32.totalorder %s21, 0
      %s217 = scalar_select %p216, %s21, 0
      %s218 = sadd.s32 %s217, %s215
      %s219 = smul.addr %s218, 8
      %s220 = scalar_lea.vmem %s0, %s219
      %p221 = pneg %p51
      %p222 = pneg %p48
      %p223 = scmp.lt.s32.totalorder %s20, 1
      %s224 = scalar_select %p223, %s20, 1
      %p225 = scmp.lt.s32.totalorder %s21, 0
      %s226 = scalar_select %p225, %s21, 0
      %s227 = sadd.s32 %s226, %s224
      %s228 = smul.addr %s227, 8
      %s229 = scalar_lea.vmem %s1, %s228
      %p230 = pneg %p79
      %p231 = pneg %p76
      %p232 = scmp.lt.s32.totalorder %s20, 1
      %s233 = scalar_select %p232, %s20, 1
      %p234 = scmp.lt.s32.totalorder %s21, 0
      %s235 = scalar_select %p234, %s21, 0
      %s236 = sadd.s32 %s235, %s233
      %s237 = scalar_lea.vmem %s2, %s236
      %p238 = pneg %p107
      %p239 = pneg %p104
      %p240 = pneg %p133
      %p241 = pneg %p130
      %p242 = scmp.lt.s32.totalorder %s20, 1
      %s243 = scalar_select %p242, %s20, 1
      %s244 = smul.addr %s243, 8
      %s245 = scalar_lea.vmem %s3, %s244
      %p246 = pneg %p159
      %p247 = pneg %p156
      %p248 = scmp.lt.s32.totalorder %s20, 1
      %s249 = scalar_select %p248, %s20, 1
      %s250 = smul.addr %s249, 8
      %s251 = scalar_lea.vmem %s4, %s250
      %p252 = scmp.lt.s32.totalorder %s20, 1
      %s253 = scalar_select %p252, %s20, 1
      %p254 = scmp.lt.s32.totalorder %s21, 0
      %s255 = scalar_select %p254, %s21, 0
      %s256 = sadd.s32 %s255, %s253
      %s257 = smul.addr %s256, 8
      %s258 = scalar_lea.vmem %s0, %s257
      %p259 = scmp.lt.s32.totalorder %s20, 1
      %s260 = scalar_select %p259, %s20, 1
      %p261 = scmp.lt.s32.totalorder %s21, 0
      %s262 = scalar_select %p261, %s21, 0
      %s263 = sadd.s32 %s262, %s260
      %s264 = smul.addr %s263, 8
      %s265 = scalar_lea.vmem %s1, %s264
      %p266 = scmp.lt.s32.totalorder %s20, 1
      %s267 = scalar_select %p266, %s20, 1
      %p268 = scmp.lt.s32.totalorder %s21, 0
      %s269 = scalar_select %p268, %s21, 0
      %s270 = sadd.s32 %s269, %s267
      %s271 = scalar_lea.vmem %s2, %s270
      %p272 = scmp.lt.s32.totalorder %s20, 1
      %s273 = scalar_select %p272, %s20, 1
      %s274 = smul.addr %s273, 8
      %s275 = scalar_lea.vmem %s3, %s274
      %p276 = scmp.lt.s32.totalorder %s20, 1
      %s277 = scalar_select %p276, %s20, 1
      %s278 = smul.addr %s277, 8
      %s279 = scalar_lea.vmem %s4, %s278
      %p280 = scmp.eq.s32.totalorder %s21, 0
      // Predicated region
      $region33: #{mpp_loss.1} parent=31 // pred_check
        %p281 = pneg %p280
      $region34: #{mpp_loss.1} parent=31 // pred_check_branch
        %283 = sbr.rel (%p281) target = $region36
      $region35: #{mpp_loss.1} parent=31 // pred_region
        %284 = vst [vmem:[#allocation2] sm:$0x1] 0.0
        %285 = vst [vmem:[#allocation3] sm:$0x1] 0.0
      $region36: #{mpp_loss.1} parent=31 // pred_fallthru
        _
      %v286 = vld [vmem:[%s258] sm:$0xff]
      %v287 = vld [vmem:[%s265] sm:$0xff]
      %v288 = vld [vmem:[%s271] sm:$0x1]
      %vm289 = vcmp.ne.s32.totalorder %v288, 0
      %v290 = vrot.slane %v286, 4
      %v291 = vmax.f32 %v286, %v290
      %v292 = vrot.slane %v291, 2
      %v293 = vmax.f32 %v291, %v292
      %v294 = vrot.slane %v293, 1
      %v295 = vmax.f32 %v293, %v294
      %v296 = vsub.f32 %v286, %v295
      %v297 = vmul.f32 %v296, 1.442695
      %v298 = vpow.pop %v297
      %v299 = vrot.slane %v298, 4
      %v300 = vadd.f32 %v298, %v299
      %v301 = vrot.slane %v300, 2
      %v302 = vadd.f32 %v300, %v301
      %v303 = vrot.slane %v302, 1
      %v304 = vadd.f32 %v302, %v303
      %v305 = vlog2.pop %v304
      %v306 = vmul.f32 %v305, 0.6931472
      %v307 = vadd.f32 %v295, %v306
      %v308 = vlaneseq
      %v309 = vshrl.u32 %v308, 7
      %v310 = vrot.slane %v287, 4
      %v311 = vmax.f32 %v287, %v310
      %v312 = vrot.slane %v311, 2
      %v313 = vmax.f32 %v311, %v312
      %v314 = vrot.slane %v313, 1
      %v315 = vmax.f32 %v313, %v314
      %vm316 = vcmp.ge.f32.partialorder %v287, %v315
      %v317 = vsel %vm316, %v309, 8
      %v318 = vrot.slane %v317, 4
      %vm319 = vcmp.lt.s32.totalorder %v317, %v318
      %v320 = vsel %vm319, %v317, %v318
      %v321 = vrot.slane %v320, 2
      %vm322 = vcmp.lt.s32.totalorder %v320, %v321
      %v323 = vsel %vm322, %v320, %v321
      %v324 = vrot.slane %v323, 1
      %vm325 = vcmp.lt.s32.totalorder %v323, %v324
      %v326 = vsel %vm325, %v323, %v324
      %vm327 = vcmp.eq.s32.totalorder %v309, %v326
      %v328 = vsel %vm327, %v286, 0.0
      %v329 = vrot.slane %v328, 4
      %v330 = vadd.f32 %v328, %v329
      %v331 = vrot.slane %v330, 2
      %v332 = vadd.f32 %v330, %v331
      %v333 = vrot.slane %v332, 1
      %v334 = vadd.f32 %v332, %v333
      %v335 = vsub.f32 %v307, %v334
      %v336 = vld [vmem:[#allocation2] sm:$0x1]
      %v337 = vsel %vm289, %v335, 0.0
      %v338 = vadd.f32 %v336, %v337
      %339 = vst [vmem:[#allocation2] sm:$0x1] %v338
      %v340 = vld [vmem:[#allocation3] sm:$0x1]
      %v341 = vsel %vm289, 1.0, 0.0
      %v342 = vadd.f32 %v340, %v341
      %343 = vst [vmem:[#allocation3] sm:$0x1] %v342
      // Predicated region
      $region37: #{mpp_loss.1} parent=31 // pred_check
        %p344 = pneg %p280
      $region38: #{mpp_loss.1} parent=31 // pred_check_branch
        %346 = sbr.rel (%p344) target = $region40
      $region39: #{mpp_loss.1} parent=31 // pred_region
        %v347 = vld [vmem:[#allocation2] sm:$0x1]
        %vm348 = vcmask 1040384
        %v349 = vsel %vm348, %v347, 0.0
        %350 = vadd.xlane.f32.xlu0 %v349
        %v351 = vpop.xlane.xlu0 %350
        %v352 = vrot.slane %v351, 4
        %v353 = vadd.f32 %v351, %v352
        %v354 = vrot.slane %v353, 2
        %v355 = vadd.f32 %v353, %v354
        %v356 = vrot.slane %v355, 1
        %v357 = vadd.f32 %v355, %v356
        %s358 = vtos %v357
        %v359 = vstv %s358
        %360 = vst [vmem:[%s275] sm:$0xff] %v359
        %v361 = vld [vmem:[#allocation3] sm:$0x1]
        %v362 = vsel %vm348, %v361, 0.0
        %363 = vadd.xlane.f32.xlu0 %v362
        %v364 = vpop.xlane.xlu0 %363
        %v365 = vrot.slane %v364, 4
        %v366 = vadd.f32 %v364, %v365
        %v367 = vrot.slane %v366, 2
        %v368 = vadd.f32 %v366, %v367
        %v369 = vrot.slane %v368, 1
        %v370 = vadd.f32 %v368, %v369
        %s371 = vtos %v370
        %v372 = vstv %s371
        %373 = vst [vmem:[%s279] sm:$0xff] %v372
      $region40: #{mpp_loss.1} parent=31 // pred_fallthru
        _
      %p374 = scmp.lt.s32.totalorder %s20, 1
      %s375 = scalar_select %p374, %s20, 1
      %s376 = smul.addr %s375, 8
      %s377 = scalar_lea.vmem %s3, %s376
      %p378 = scmp.lt.s32.totalorder %s20, 1
      %s379 = scalar_select %p378, %s20, 1
      %s380 = smul.addr %s379, 8
      %s381 = scalar_lea.vmem %s4, %s380
      // Predicated region
      $region41: #{mpp_loss.1} parent=31 // pred_check
        %p382 = pneg %p130
      $region42: #{mpp_loss.1} parent=31 // pred_check_branch
        %384 = sbr.rel (%p382) target = $region44
      $region43: #{mpp_loss.1} parent=31 // pred_region
        _
      $region44: #{mpp_loss.1} parent=31 // pred_fallthru
        _
      // Predicated region
      $region45: #{mpp_loss.1} parent=31 // pred_check
        %p385 = pneg %p156
      $region46: #{mpp_loss.1} parent=31 // pred_check_branch
        %387 = sbr.rel (%p385) target = $region48
      $region47: #{mpp_loss.1} parent=31 // pred_region
        _
      $region48: #{mpp_loss.1} parent=31 // pred_fallthru
        _
    $region32: #{mpp_loss.1} parent=5 // pred_fallthru
      _
    %p388 = scmp.le.s32.totalorder 2, %s11
    // Predicated region
    $region49: #{mpp_loss.1} parent=5 // pred_check
      %p389 = pneg %p388
    $region50: #{mpp_loss.1} parent=5 // pred_check_branch
      %391 = sbr.rel (%p389) target = $region52
    $region51: #{mpp_loss.1} parent=5 // pred_region
      %s392 = ssub.s32 %s11, 2
      // Predicated region
      $region53: #{mpp_loss.1} parent=51 // pred_check
        %p393 = pneg %p136
      $region54: #{mpp_loss.1} parent=51 // pred_check_branch
        %395 = sbr.rel (%p393) target = $region56
      $region55: #{mpp_loss.1} parent=51 // pred_region
        %p396 = scmp.lt.s32.totalorder %s22, 1
        %s397 = scalar_select %p396, %s22, 1
        %s398 = smul.addr %s397, 8
        %s399 = scalar_lea.vmem %s3, %s398
      $region56: #{mpp_loss.1} parent=51 // pred_fallthru
        _
      // Predicated region
      $region57: #{mpp_loss.1} parent=51 // pred_check
        %p400 = pneg %p162
      $region58: #{mpp_loss.1} parent=51 // pred_check_branch
        %402 = sbr.rel (%p400) target = $region60
      $region59: #{mpp_loss.1} parent=51 // pred_region
        %p403 = scmp.lt.s32.totalorder %s22, 1
        %s404 = scalar_select %p403, %s22, 1
        %s405 = smul.addr %s404, 8
        %s406 = scalar_lea.vmem %s4, %s405
      $region60: #{mpp_loss.1} parent=51 // pred_fallthru
        _
    $region52: #{mpp_loss.1} parent=5 // pred_fallthru
      _
  $region6: #{mpp_loss.1} parent=0 // loop_footer
    %s15 = sadd.s32 1, %s11
  $region7: #{mpp_loss.1} parent=0 // loop_footer_branch
    %10 = sbr.rel target = $region3
  $region8: #{mpp_loss.1} parent=0 // loop_exit
    _

</llo_original>
